<compile_context>
chip_gen: v7x
topology: tpu7x:2x2x1
jax: 0.10.0
libtpu: 0.0.40
codegen_flags: <defaults>
</compile_context>

<pallas_src>
import math
import numpy as np
import jax
import jax.numpy as jnp
from jax import lax
from jax.experimental import pallas as pl
from jax.experimental.pallas import tpu as pltpu


def _round_up(x, m):
    return ((x + m - 1) // m) * m


# ----------------------------------------------------------------------------
# Pallas kernel: tiled linear layer  (out = x @ W + b)
# ----------------------------------------------------------------------------
def _linear_kernel(x_ref, w_ref, b_ref, o_ref, acc_ref):
    @pl.when(pl.program_id(2) == 0)
    def _init():
        acc_ref[...] = jnp.zeros_like(acc_ref)

    acc_ref[...] += jnp.dot(x_ref[...], w_ref[...],
                            preferred_element_type=jnp.float32)

    @pl.when(pl.program_id(2) == pl.num_programs(2) - 1)
    def _finalize():
        o_ref[...] = (acc_ref[...] + b_ref[...]).astype(o_ref.dtype)


def pallas_linear(x, w, b, *, tm=512, tn=512, tk=512,
                  matmul_dtype=jnp.bfloat16):
    """Tiled x @ w + b.  MXU inputs default to bf16 (accumulation stays f32)."""
    M, K = x.shape
    N = w.shape[1]
    tm = min(tm, _round_up(M, 8))
    tn = min(tn, _round_up(N, 128))
    tk = min(tk, _round_up(K, 128))
    Mp, Kp, Np = _round_up(M, tm), _round_up(K, tk), _round_up(N, tn)

    if matmul_dtype is not None:
        x = x.astype(matmul_dtype)
        w = w.astype(matmul_dtype)
    xp = jnp.pad(x, ((0, Mp - M), (0, Kp - K)))
    wp = jnp.pad(w, ((0, Kp - K), (0, Np - N)))
    bp = jnp.pad(b.astype(jnp.float32), (0, Np - N)).reshape(1, Np)

    out = pl.pallas_call(
        _linear_kernel,
        out_shape=jax.ShapeDtypeStruct((Mp, Np), jnp.float32),
        grid=(Mp // tm, Np // tn, Kp // tk),
        in_specs=[
            pl.BlockSpec((tm, tk), lambda i, j, kk: (i, kk)),
            pl.BlockSpec((tk, tn), lambda i, j, kk: (kk, j)),
            pl.BlockSpec((1, tn), lambda i, j, kk: (0, j)),
        ],
        out_specs=pl.BlockSpec((tm, tn), lambda i, j, kk: (i, j)),
        scratch_shapes=[pltpu.VMEM((tm, tn), jnp.float32)],
        compiler_params=pltpu.CompilerParams(
            dimension_semantics=("parallel", "parallel", "arbitrary")),
    )(xp, wp, bp)
    return out[:M, :N]


# ----------------------------------------------------------------------------
# Pallas kernel: attention + CAM (`local_full`) — grid = (heads, query tiles)
# ----------------------------------------------------------------------------
def _make_attn_cam_kernel(B, T, Tp, D, tq, start_budget, recent_budget):
    TOPK = 16
    MERGE_BUDGET = 128
    q_start = max(T - MERGE_BUDGET, 0)           # torch negative-slice clamping
    n_ratio_rows = T - q_start
    inv_norm = 1.0 / math.sqrt(float(D))         # 1 / norm_factor
    NEG = float(jnp.finfo(jnp.float32).min)

    def kernel(q_ref, k_ref, v_ref, am_ref, out_ref, wsb_ref, s1_ref,
               colsum_ref, ratsum_ref):
        qi = pl.program_id(1)
        nq = pl.num_programs(1)

        @pl.when(qi == 0)
        def _init():
            colsum_ref[...] = jnp.zeros_like(colsum_ref)
            ratsum_ref[...] = jnp.zeros_like(ratsum_ref)
            s1_ref[...] = jnp.zeros_like(s1_ref)

        q = q_ref[...]                           # (B, tq, D)  bf16
        k = k_ref[...]                           # (B, Tp, D)  bf16 full keys/head
        v = v_ref[...]                           # (B, Tp, D)  bf16
        am = am_ref[...]                         # (B, Tp)     f32 additive HF mask

        # scores = (q @ k^T) / sqrt(D) — bf16 MXU inputs, f32 accumulation.
        s = jnp.einsum("bqd,bkd->bqk", q, k,
                       preferred_element_type=jnp.float32) * inv_norm

        # causal mask + additive HF mask folded into a single where (one NEG).
        row = qi * tq + lax.broadcasted_iota(jnp.int32, (1, tq, 1), 1)
        col = lax.broadcasted_iota(jnp.int32, (1, 1, Tp), 2)
        s = jnp.where(col <= row, s + am[:, None, :], NEG)

        # unnormalized softmax; fold 1/l into the outputs (EUP reciprocal)
        # instead of dividing the whole (B,tq,Tp) matrix on the VALU.
        m = jnp.max(s, axis=-1, keepdims=True)
        e = jnp.exp(s - m)                                   # (B, tq, Tp) f32
        l = jnp.sum(e, axis=-1, keepdims=True)               # (B, tq, 1)
        inv_l_fast = pl.reciprocal(l, approx=True)           # output scaling
        inv_l_row = 1.0 / l[:, :, 0]                         # (B, tq) exact (stats)

        # ---- CAM column statistics: one thin MXU matmul per query tile ----
        row_r = row[:, :, 0]                                 # (1, tq)
        valid_row = row_r < T
        in_ratio = jnp.logical_and(row_r >= q_start, valid_row)
        w0 = jnp.where(valid_row, inv_l_row, 0.0)            # (B, tq)
        w1 = jnp.where(in_ratio, inv_l_row, 0.0)             # (B, tq)
        two = lax.broadcasted_iota(jnp.int32, (1, 2, 1), 1)
        stats_w = jnp.where(two == 0, w0[:, None, :], w1[:, None, :])  # (B,2,tq)
        stats = jnp.einsum("brq,bqk->brk", stats_w, e,
                           preferred_element_type=jnp.float32)         # (B,2,Tp)
        stats = jnp.sum(stats, axis=0)                                 # (2, Tp)
        colsum_ref[...] += stats[0:1, :]
        ratsum_ref[...] += stats[1:2, :]

        # ---- per-query-tile outputs ---------------------------------------
        e_bf = e.astype(v.dtype)                             # bf16 for PV MXU
        out_ref[...] = jnp.einsum("bqk,bkd->bqd", e_bf, v,
                                  preferred_element_type=jnp.float32) * inv_l_fast
        # softmax column at the rewritten value row, stored lane-dense (B, tq).
        wsb_col = e[:, :, start_budget] * inv_l_fast[:, :, 0]          # (B, tq)
        wsb_ref[...] = wsb_col[None, :, :]                             # (1, B, tq)

        # ---- finalize: top-16 merge + score1 on the last query tile --------
        @pl.when(qi == nq - 1)
        def _finalize():
            # colsum == T * attn_score; the 1/T mean is order-preserving so it
            # is skipped for the top-k selection.
            colsum = colsum_ref[...]                         # (1, Tp)
            ratio = ratsum_ref[...] * (1.0 / n_ratio_rows)   # (1, Tp)
            cidx = lax.broadcasted_iota(jnp.int32, (1, Tp), 1)
            score = jnp.where(cidx < start_budget, 0.0, colsum)
            sel = jnp.where(cidx < (T - recent_budget), score, -jnp.inf)
            # top-16 via 16 argmax steps (matches torch.topk for distinct vals)
            mask = jnp.zeros((1, Tp), jnp.float32)
            for _ in range(TOPK):
                mx = jnp.max(sel, axis=1, keepdims=True)
                idx = jnp.min(jnp.where(sel == mx, cidx, Tp),
                              axis=1, keepdims=True)
                hit = cidx == idx
                mask = mask + hit.astype(jnp.float32)
                sel = jnp.where(hit, -jnp.inf, sel)
            merge_w = mask * ratio                           # (1, Tp)
            # score1 via the MXU (uses the *pre-rewrite* values, torch order).
            mw = jnp.broadcast_to(merge_w[:, None, :], (B, 1, Tp)).astype(v.dtype)
            s1 = jnp.einsum("brk,bkd->brd", mw, v,
                            preferred_element_type=jnp.float32)        # (B,1,D)
            s1_ref[...] = s1

    return kernel


def _attn_vmem_limit(B, Tp, D, tq, kv_buffers):
    bf16, f32 = 2, 4
    kv = 2 * kv_buffers * B * Tp * D * bf16        # resident K and V blocks
    qio = 2 * B * tq * D * (bf16 + f32)            # q in + out, double buffered
    small = 2 * (B * tq + B * D + 2 * Tp) * f32    # wsb / s1 / colsum / ratsum
    temps = 8 * B * tq * Tp * f32                  # s, e, e_bf, stats (slack)
    need = kv + qio + small + temps
    return int(min(max(need, 32 * 1024 * 1024), 64 * 1024 * 1024))


def pallas_attention_cam(q, k, v, amask2d, start_budget, recent_budget, *,
                         tq=128, kv_single_buffer=True):
    B, H, T, D = q.shape
    tq = min(tq, _round_up(T, 8))
    Tp = _round_up(T, tq)
    nq = Tp // tq

    # bf16 q/k/v at the kernel boundary (halves resident K/V VMEM + DMA bytes).
    q = q.astype(jnp.bfloat16)
    k = k.astype(jnp.bfloat16)
    v = v.astype(jnp.bfloat16)
    amask2d = amask2d.astype(jnp.float32)
    pad_t = Tp - T
    if pad_t:
        q = jnp.pad(q, ((0, 0), (0, 0), (0, pad_t), (0, 0)))
        k = jnp.pad(k, ((0, 0), (0, 0), (0, pad_t), (0, 0)))
        v = jnp.pad(v, ((0, 0), (0, 0), (0, pad_t), (0, 0)))
        amask2d = jnp.pad(amask2d, ((0, 0), (0, pad_t)),
                          constant_values=float(jnp.finfo(jnp.float32).min))

    kernel = _make_attn_cam_kernel(B, T, Tp, D, tq, start_budget, recent_budget)

    def run(single_kv_buffer):
        kv_kwargs = {}
        if single_kv_buffer:
            # K/V block index only changes on the head axis; a single buffer
            # halves resident full-length K/V VMEM (v7x 64 MiB / v5e 16 MiB).
            kv_kwargs["pipeline_mode"] = pl.Buffered(1)
        q_blk = pl.BlockSpec((B, None, tq, D), lambda h, i: (0, h, i, 0))
        kv_blk = pl.BlockSpec((B, None, Tp, D), lambda h, i: (0, h, 0, 0),
                              **kv_kwargs)
        am_blk = pl.BlockSpec((B, Tp), lambda h, i: (0, 0))
        return pl.pallas_call(
            kernel,
            out_shape=(
                jax.ShapeDtypeStruct((B, H, Tp, D), jnp.float32),   # w @ v
                jax.ShapeDtypeStruct((H, nq, B, tq), jnp.float32),  # w[:,:,sb]
                jax.ShapeDtypeStruct((B, H, 1, D), jnp.float32),    # score1
            ),
            grid=(H, nq),
            in_specs=[q_blk, kv_blk, kv_blk, am_blk],
            out_specs=(
                pl.BlockSpec((B, None, tq, D), lambda h, i: (0, h, i, 0)),
                pl.BlockSpec((None, 1, B, tq), lambda h, i: (h, i, 0, 0)),
                pl.BlockSpec((B, None, 1, D), lambda h, i: (0, h, 0, 0)),
            ),
            scratch_shapes=[pltpu.VMEM((1, Tp), jnp.float32),
                            pltpu.VMEM((1, Tp), jnp.float32)],
            compiler_params=pltpu.CompilerParams(
                dimension_semantics=("parallel", "arbitrary"),
                vmem_limit_bytes=_attn_vmem_limit(
                    B, Tp, D, tq, 1 if single_kv_buffer else 2)),
        )(q, k, v, amask2d)

    if kv_single_buffer:
        try:
            out_base, wsb, s1 = run(True)
        except Exception:
            # pl.Buffered(1) not supported by this jax version: fall back to
            # default double-buffered K/V blocks.
            out_base, wsb, s1 = run(False)
    else:
        out_base, wsb, s1 = run(False)

    wsb = wsb.transpose(2, 0, 1, 3).reshape(B, H, Tp)     # lane-dense -> (B,H,Tp)
    return out_base[:, :, :T], wsb[:, :, :T], s1[:, :, 0, :]


# ----------------------------------------------------------------------------
# Plain-JAX glue: rotary embedding tables / application
# ----------------------------------------------------------------------------
def rotary_tables(rot_dim, max_pos, base):
    inv_freq = 1.0 / (base ** (jnp.arange(0, rot_dim, 2, dtype=jnp.float32)
                               / rot_dim))
    t = jnp.arange(max_pos, dtype=jnp.float32)
    freqs = jnp.einsum("i,j->ij", t, inv_freq)
    emb = jnp.concatenate([freqs, freqs], axis=-1)      # (max_pos, rot_dim)
    return jnp.cos(emb), jnp.sin(emb)


def rotate_half(x):
    half = x.shape[-1] // 2
    x1, x2 = x[..., :half], x[..., half:]
    return jnp.concatenate([-x2, x1], axis=-1)


def gptneox_attention_cam_forward(hidden_states, attention_mask, position_ids,
                                  params, cfg, *, attn_tq=128):
    B, T, hidden = hidden_states.shape
    H = cfg["num_attention_heads"]
    D = hidden // H
    rot = int(D * cfg["rotary_pct"])

    # fused QKV projection (tiled bf16 Pallas matmul, f32 accumulation)
    qkv = pallas_linear(hidden_states.reshape(B * T, hidden),
                        params["w_qkv"], params["b_qkv"])
    qkv = qkv.reshape(B, T, H, 3 * D)
    q = qkv[..., :D].transpose(0, 2, 1, 3)              # (B, H, T, D)
    k = qkv[..., D:2 * D].transpose(0, 2, 1, 3)
    v = qkv[..., 2 * D:].transpose(0, 2, 1, 3)

    # rotary position embedding (glue)
    cos, sin = rotary_tables(rot, cfg["max_position_embeddings"],
                             cfg["rotary_emb_base"])
    cos_p = cos[position_ids][:, None, :, :]            # (B, 1, T, rot)
    sin_p = sin[position_ids][:, None, :, :]
    q_rot, q_pass = q[..., :rot], q[..., rot:]
    k_rot, k_pass = k[..., :rot], k[..., rot:]
    q = jnp.concatenate([q_rot * cos_p + rotate_half(q_rot) * sin_p, q_pass], -1)
    k = jnp.concatenate([k_rot * cos_p + rotate_half(k_rot) * sin_p, k_pass], -1)

    # CAM budgets (first call: previous_scores is None)
    start_budget = int(cfg["start_ratio"] * T)
    recent_budget = int(cfg["recent_ratio"] * T)
    assert T - recent_budget >= 16, "torch.topk(k=16) needs T - recent_budget >= 16"

    amask2d = attention_mask.reshape(B, T).astype(jnp.float32)

    out_base, wsb, score1 = pallas_attention_cam(
        q, k, v, amask2d, start_budget, recent_budget, tq=attn_tq)

    # CAM value rewrite touches only row `start_budget`; apply it as a rank-1
    # correction: w @ v_new == w @ v + w[:,:,sb] * (score1 - v[:,sb]).
    delta = score1 - v[:, :, start_budget, :]                    # (B, H, D)
    attn_out = out_base + wsb[..., None] * delta[:, :, None, :]  # (B, H, T, D)
    v_new = v.at[:, :, start_budget, :].set(score1)

    # merge heads + dense projection (tiled bf16 Pallas matmul)
    ctx = attn_out.transpose(0, 2, 1, 3).reshape(B * T, hidden)
    out = pallas_linear(ctx, params["w_dense"], params["b_dense"])
    out = out.reshape(B, T, hidden)

    present = (k, v_new)   # use_cache=True path (key, CAM-modified value)
    return out, present


# ----------------------------------------------------------------------------
# Pure-JAX reference (mirrors the torch first-call forward) for validation
# ----------------------------------------------------------------------------
def reference_forward(hidden_states, attention_mask, position_ids, params, cfg):
    B, T, hidden = hidden_states.shape
    H = cfg["num_attention_heads"]
    D = hidden // H
    rot = int(D * cfg["rotary_pct"])
    hp = jax.lax.Precision.HIGHEST

    qkv = (jnp.dot(hidden_states.reshape(B * T, hidden), params["w_qkv"],
                   precision=hp) + params["b_qkv"]).reshape(B, T, H, 3 * D)
    q = qkv[..., :D].transpose(0, 2, 1, 3)
    k = qkv[..., D:2 * D].transpose(0, 2, 1, 3)
    v = qkv[..., 2 * D:].transpose(0, 2, 1, 3)

    cos, sin = rotary_tables(rot, cfg["max_position_embeddings"],
                             cfg["rotary_emb_base"])
    cos_p = cos[position_ids][:, None, :, :]
    sin_p = sin[position_ids][:, None, :, :]
    q_rot, q_pass = q[..., :rot], q[..., rot:]
    k_rot, k_pass = k[..., :rot], k[..., rot:]
    q = jnp.concatenate([q_rot * cos_p + rotate_half(q_rot) * sin_p, q_pass], -1)
    k = jnp.concatenate([k_rot * cos_p + rotate_half(k_rot) * sin_p, k_pass], -1)

    start_budget = int(cfg["start_ratio"] * T)
    recent_budget = int(cfg["recent_ratio"] * T)

    s = jnp.einsum("bhqd,bhkd->bhqk", q, k, precision=hp) / math.sqrt(D)
    causal = jnp.tril(jnp.ones((T, T), dtype=bool))
    s = jnp.where(causal[None, None], s, jnp.finfo(jnp.float32).min)
    s = s + attention_mask.reshape(B, 1, 1, T)
    w = jax.nn.softmax(s, axis=-1)

    attn_score = w.sum(0).mean(1)                                # (H, T)
    q_start = max(T - 128, 0)
    ratio = w[:, :, q_start:, :].sum(0).mean(1)                  # (H, T)
    attn_score = attn_score.at[:, :start_budget].set(0.0)
    selected = attn_score[:, :T - recent_budget]
    _, topi = jax.lax.top_k(selected, 16)
    merge_mask = jnp.zeros((H, T), jnp.float32)
    merge_mask = merge_mask.at[jnp.arange(H)[:, None], topi].set(1.0)
    merge_mask = merge_mask * ratio
    score1 = jnp.sum(v * merge_mask[None, :, :, None], axis=-2)  # (B, H, D)
    v_new = v.at[:, :, start_budget, :].set(score1)

    attn_out = jnp.einsum("bhqk,bhkd->bhqd", w, v_new, precision=hp)
    ctx = attn_out.transpose(0, 2, 1, 3).reshape(B * T, hidden)
    out = (jnp.dot(ctx, params["w_dense"], precision=hp)
           + params["b_dense"]).reshape(B, T, hidden)
    return out, (k, v_new)


# ----------------------------------------------------------------------------
if __name__ == "__main__":
    cfg = dict(
        num_attention_heads=4,
        hidden_size=64,
        rotary_pct=0.25,
        max_position_embeddings=128,
        rotary_emb_base=10000.0,
        start_ratio=0.1,
        recent_ratio=0.25,
    )
    B, T = 2, 64
    hidden = cfg["hidden_size"]

    key = jax.random.PRNGKey(0)
    k1, k2, k3, k4, k5 = jax.random.split(key, 5)
    params = dict(
        w_qkv=0.02 * jax.random.normal(k1, (hidden, 3 * hidden), jnp.float32),
        b_qkv=0.01 * jax.random.normal(k2, (3 * hidden,), jnp.float32),
        w_dense=0.02 * jax.random.normal(k3, (hidden, hidden), jnp.float32),
        b_dense=0.01 * jax.random.normal(k4, (hidden,), jnp.float32),
    )
    hidden_states = jax.random.normal(k5, (B, T, hidden), jnp.float32)
    attention_mask = jnp.zeros((B, 1, 1, T), jnp.float32)   # additive HF mask
    position_ids = jnp.broadcast_to(jnp.arange(T, dtype=jnp.int32), (B, T))

    # attn_tq=32 exercises the multi-query-tile statistics accumulation path.
    out, (present_k, present_v) = gptneox_attention_cam_forward(
        hidden_states, attention_mask, position_ids, params, cfg, attn_tq=32)
    out = jax.block_until_ready(out)
    present_v = jax.block_until_ready(present_v)

    ref_out, (ref_k, ref_v) = reference_forward(
        hidden_states, attention_mask, position_ids, params, cfg)

    np.testing.assert_allclose(np.asarray(out), np.asarray(ref_out),
                               rtol=5e-3, atol=5e-3)
    np.testing.assert_allclose(np.asarray(present_v), np.asarray(ref_v),
                               rtol=5e-3, atol=5e-3)
    print("KERNEL_OK")
</pallas_src>

<mosaic_0001>
module attributes {stable_mosaic.version = 11 : i64} {
  func.func @_linear_kernel(%arg0: i32, %arg1: i32, %arg2: i32, %arg3: memref<128x128xbf16, #tpu.memory_space<vmem>>, %arg4: memref<128x256xbf16, #tpu.memory_space<vmem>>, %arg5: memref<1x256xf32, #tpu.memory_space<vmem>>, %arg6: memref<128x256xf32, #tpu.memory_space<vmem>>, %arg7: memref<128x256xf32, #tpu.memory_space<vmem>>) attributes {dimension_semantics = [#tpu.dimension_semantics<parallel>, #tpu.dimension_semantics<parallel>, #tpu.dimension_semantics<arbitrary>], iteration_bounds = array<i64: 1, 1, 1>, scalar_prefetch = 0 : i64, scratch_operands = 1 : i64, tpu.core_type = #tpu.core_type<tc>, window_params = [{transform_indices = @transform_0, window_bounds = array<i64: 128, 128>}, {transform_indices = @transform_1, window_bounds = array<i64: 128, 256>}, {transform_indices = @transform_2, window_bounds = array<i64: 1, 256>}, {transform_indices = @transform_3, window_bounds = array<i64: 128, 256>}]} {
    %c0_i32 = arith.constant 0 : i32
    %0 = arith.cmpi eq, %arg2, %c0_i32 : i32
    %1 = arith.extui %0 : i1 to i32
    %c0_i32_0 = arith.constant 0 : i32
    %2 = arith.cmpi ne, %1, %c0_i32_0 : i32
    scf.if %2 {
      %cst_10 = arith.constant 0.000000e+00 : f32
      %12 = vector.broadcast %cst_10 : f32 to vector<128x256xf32>
      %c0_11 = arith.constant 0 : index
      %c0_12 = arith.constant 0 : index
      %13 = vector.load %arg7[%c0_11, %c0_12] : memref<128x256xf32, #tpu.memory_space<vmem>>, vector<128x256xf32>
      tpu.vector_store %arg7[%c0_11, %c0_12], %12 {strides = array<i32>} : memref<128x256xf32, #tpu.memory_space<vmem>>, vector<128x256xf32>,
    } else {
    }
    %c0 = arith.constant 0 : index
    %c0_1 = arith.constant 0 : index
    %3 = vector.load %arg7[%c0, %c0_1] : memref<128x256xf32, #tpu.memory_space<vmem>>, vector<128x256xf32>
    %c0_2 = arith.constant 0 : index
    %c0_3 = arith.constant 0 : index
    %4 = vector.load %arg3[%c0_2, %c0_3] : memref<128x128xbf16, #tpu.memory_space<vmem>>, vector<128x128xbf16>
    %c0_4 = arith.constant 0 : index
    %c0_5 = arith.constant 0 : index
    %5 = vector.load %arg4[%c0_4, %c0_5] : memref<128x256xbf16, #tpu.memory_space<vmem>>, vector<128x256xbf16>
    %cst = arith.constant dense<0.000000e+00> : vector<128x256xf32>
    %6 = tpu.matmul %4, %5, %cst {dimension_numbers = #tpu.dot_dimension_numbers<[1], [0], [0], [1], [0, 0, 1, 1], [], []>} : vector<128x128xbf16>, vector<128x256xbf16>, vector<128x256xf32> -> vector<128x256xf32>
    %7 = arith.addf %3, %6 : vector<128x256xf32>
    %c0_6 = arith.constant 0 : index
    %c0_7 = arith.constant 0 : index
    %8 = vector.load %arg7[%c0_6, %c0_7] : memref<128x256xf32, #tpu.memory_space<vmem>>, vector<128x256xf32>
    tpu.vector_store %arg7[%c0_6, %c0_7], %7 {strides = array<i32>} : memref<128x256xf32, #tpu.memory_space<vmem>>, vector<128x256xf32>,
    %c0_i32_8 = arith.constant 0 : i32
    %9 = arith.cmpi eq, %arg2, %c0_i32_8 : i32
    %10 = arith.extui %9 : i1 to i32
    %c0_i32_9 = arith.constant 0 : i32
    %11 = arith.cmpi ne, %10, %c0_i32_9 : i32
    scf.if %11 {
      %c0_10 = arith.constant 0 : index
      %c0_11 = arith.constant 0 : index
      %12 = vector.load %arg7[%c0_10, %c0_11] : memref<128x256xf32, #tpu.memory_space<vmem>>, vector<128x256xf32>
      %c0_12 = arith.constant 0 : index
      %c0_13 = arith.constant 0 : index
      %13 = vector.load %arg5[%c0_12, %c0_13] : memref<1x256xf32, #tpu.memory_space<vmem>>, vector<1x256xf32>
      %14 = vector.broadcast %13 : vector<1x256xf32> to vector<128x256xf32>
      %15 = arith.addf %12, %14 : vector<128x256xf32>
      %c0_14 = arith.constant 0 : index
      %c0_15 = arith.constant 0 : index
      %16 = vector.load %arg6[%c0_14, %c0_15] : memref<128x256xf32, #tpu.memory_space<vmem>>, vector<128x256xf32>
      tpu.vector_store %arg6[%c0_14, %c0_15], %15 {strides = array<i32>} : memref<128x256xf32, #tpu.memory_space<vmem>>, vector<128x256xf32>,
    } else {
    }
    return
  }
  func.func @transform_0(%arg0: i32, %arg1: i32, %arg2: i32) -> (i32, i32) {
    %c0_i32 = arith.constant 0 : i32
    return %arg0, %arg2 : i32, i32
  }
  func.func @transform_1(%arg0: i32, %arg1: i32, %arg2: i32) -> (i32, i32) {
    %c0_i32 = arith.constant 0 : i32
    return %arg2, %arg1 : i32, i32
  }
  func.func @transform_2(%arg0: i32, %arg1: i32, %arg2: i32) -> (i32, i32) {
    %c0_i32 = arith.constant 0 : i32
    %c0_i32_0 = arith.constant 0 : i32
    return %c0_i32, %arg1 : i32, i32
  }
  func.func @transform_3(%arg0: i32, %arg1: i32, %arg2: i32) -> (i32, i32) {
    %c0_i32 = arith.constant 0 : i32
    return %arg0, %arg1 : i32, i32
  }
}

</mosaic_0001>

<llo_original>
// kernel: tpu_custom_call.1
$region0: #{tpu_custom_call.1}
  #allocation0 [shape = 'u32[]', space=smem, size = 0x4, offset = 0x4, fixed_abs, tag = 'smem constant byte address 0x4 - core index']
  #allocation1 [shape = 'u32[144,128]{1,0:T(1,128)}', space=vmem, size = 0x12000, scoped, tag = 'internal scratch']
  #allocation2 [shape = 'f32[128,256]{1,0:T(8,128)}', space=vmem, size = 0x20000, scoped, tag = 'scratch operand']
  %s0 = inlined_call_operand.hbm [shape: bf16[128,128], index: 0, kind: input, shape index: {}]
  %s1 = inlined_call_operand.hbm [shape: bf16[128,256], index: 1, kind: input, shape index: {}]
  %s2 = inlined_call_operand.vmem [shape: f32[1,256], index: 2, kind: input, shape index: {}]
  %s3 = inlined_call_operand.hbm [shape: f32[128,256], index: 3, kind: output, shape index: {}]
  %s4 = sld [smem:[#allocation0]]
  $region38: #{tpu_custom_call.1} parent=0
    _
  %s6 = ssub.s32 1, %s4
  %s7 = scalar_select 0, %s6, %s4
  $region1: #{tpu_custom_call.1} parent=0
    #allocation3 [shape = 'u8[32768]{0}', space=vmem, size = 0x8000, scoped, tag = 'input window, operand 0, single buffered']
    #allocation4 [shape = 's32[1]{0}', space=sflag, size = 0x4, scoped, tag = 'scoped memory for tpu_custom_call.1']
    #allocation5 [shape = 's32[1]{0}', space=sflag, size = 0x4, scoped, tag = 'scoped memory for tpu_custom_call.1']
    #allocation6 [shape = 'u8[65536]{0}', space=vmem, size = 0x10000, scoped, tag = 'input window, operand 1, single buffered']
    #allocation7 [shape = 's32[1]{0}', space=sflag, size = 0x4, scoped, tag = 'scoped memory for tpu_custom_call.1']
    #allocation8 [shape = 'u8[131072]{0}', space=vmem, size = 0x20000, scoped, tag = 'output window, operand 0, single buffered']
    %8 = vsyncpa [#allocation4], 0
    %9 = vsyncpa [#allocation7], 0
    %10 = vsyncpa [#allocation5], 0
    // Predicated region
    $region2: #{tpu_custom_call.1} parent=1 // pred_check
      _
    $region3: #{tpu_custom_call.1} parent=1 // pred_check_branch
      %12 = sbr.rel (0) target = $region5
    $region4: #{tpu_custom_call.1} parent=1 // pred_region
      %s14 = ssub.s32 1024, 1024
      %15 = vsyncadd [#allocation4], %s14
      %s16 = sshll.u32 [#allocation3], 4
      %s17 = int_to_ptr.vmem [resolvable:$true] %s16
      %22 = dma.hbm_to_vmem [thread:$0]  %s0, 1024, %s17, [#allocation4], 64, 64, 4
    $region5: #{tpu_custom_call.1} parent=1 // pred_fallthru
      _
    // Predicated region
    $region6: #{tpu_custom_call.1} parent=1 // pred_check
      _
    $region7: #{tpu_custom_call.1} parent=1 // pred_check_branch
      %24 = sbr.rel (0) target = $region9
    $region8: #{tpu_custom_call.1} parent=1 // pred_region
      %s26 = ssub.s32 2048, 2048
      %27 = vsyncadd [#allocation7], %s26
      %s28 = sshll.u32 [#allocation6], 4
      %s29 = int_to_ptr.vmem [resolvable:$true] %s28
      %34 = dma.hbm_to_vmem [thread:$0]  %s1, 2048, %s29, [#allocation7], 128, 128, 8
    $region9: #{tpu_custom_call.1} parent=1 // pred_fallthru
      _
    // Predicated region
    $region10: #{tpu_custom_call.1} parent=1 // pred_check
      _
    $region11: #{tpu_custom_call.1} parent=1 // pred_check_branch
      %36 = sbr.rel (0) target = $region13
    $region12: #{tpu_custom_call.1} parent=1 // pred_region
      _
    $region13: #{tpu_custom_call.1} parent=1 // pred_fallthru
      _
    // Predicated region
    $region14: #{tpu_custom_call.1} parent=1 // pred_check
      _
    $region15: #{tpu_custom_call.1} parent=1 // pred_check_branch
      %38 = sbr.rel (0) target = $region17
    $region16: #{tpu_custom_call.1} parent=1 // pred_region
      %39 = dma.done [#allocation4], 1024
    $region17: #{tpu_custom_call.1} parent=1 // pred_fallthru
      _
    // Predicated region
    $region18: #{tpu_custom_call.1} parent=1 // pred_check
      _
    $region19: #{tpu_custom_call.1} parent=1 // pred_check_branch
      %41 = sbr.rel (0) target = $region21
    $region20: #{tpu_custom_call.1} parent=1 // pred_region
      %42 = dma.done [#allocation7], 2048
    $region21: #{tpu_custom_call.1} parent=1 // pred_fallthru
      _
    %p44 = scmp.eq.s32.totalorder 0, 0
    // Predicated region
    $region22: #{tpu_custom_call.1} parent=1 // pred_check
      %p45 = pneg %p44
    $region23: #{tpu_custom_call.1} parent=1 // pred_check_branch
      %47 = sbr.rel (%p45) target = $region25
    $region24: #{tpu_custom_call.1} parent=1 // pred_region
      %48 = vst [vmem:[#allocation2] sm:$0xff] 0.0
      %49 = vst [vmem:[#allocation2 + $0x8] sm:$0xff] 0.0
      %50 = vst [vmem:[#allocation2 + $0x10] sm:$0xff] 0.0
      %51 = vst [vmem:[#allocation2 + $0x18] sm:$0xff] 0.0
      %52 = vst [vmem:[#allocation2 + $0x20] sm:$0xff] 0.0
      %53 = vst [vmem:[#allocation2 + $0x28] sm:$0xff] 0.0
      %54 = vst [vmem:[#allocation2 + $0x30] sm:$0xff] 0.0
      %55 = vst [vmem:[#allocation2 + $0x38] sm:$0xff] 0.0
      %56 = vst [vmem:[#allocation2 + $0x40] sm:$0xff] 0.0
      %57 = vst [vmem:[#allocation2 + $0x48] sm:$0xff] 0.0
      %58 = vst [vmem:[#allocation2 + $0x50] sm:$0xff] 0.0
      %59 = vst [vmem:[#allocation2 + $0x58] sm:$0xff] 0.0
      %60 = vst [vmem:[#allocation2 + $0x60] sm:$0xff] 0.0
      %61 = vst [vmem:[#allocation2 + $0x68] sm:$0xff] 0.0
      %62 = vst [vmem:[#allocation2 + $0x70] sm:$0xff] 0.0
      %63 = vst [vmem:[#allocation2 + $0x78] sm:$0xff] 0.0
      %64 = vst [vmem:[#allocation2 + $0x80] sm:$0xff] 0.0
      %65 = vst [vmem:[#allocation2 + $0x88] sm:$0xff] 0.0
      %66 = vst [vmem:[#allocation2 + $0x90] sm:$0xff] 0.0
      %67 = vst [vmem:[#allocation2 + $0x98] sm:$0xff] 0.0
      %68 = vst [vmem:[#allocation2 + $0xa0] sm:$0xff] 0.0
      %69 = vst [vmem:[#allocation2 + $0xa8] sm:$0xff] 0.0
      %70 = vst [vmem:[#allocation2 + $0xb0] sm:$0xff] 0.0
      %71 = vst [vmem:[#allocation2 + $0xb8] sm:$0xff] 0.0
      %72 = vst [vmem:[#allocation2 + $0xc0] sm:$0xff] 0.0
      %73 = vst [vmem:[#allocation2 + $0xc8] sm:$0xff] 0.0
      %74 = vst [vmem:[#allocation2 + $0xd0] sm:$0xff] 0.0
      %75 = vst [vmem:[#allocation2 + $0xd8] sm:$0xff] 0.0
      %76 = vst [vmem:[#allocation2 + $0xe0] sm:$0xff] 0.0
      %77 = vst [vmem:[#allocation2 + $0xe8] sm:$0xff] 0.0
      %78 = vst [vmem:[#allocation2 + $0xf0] sm:$0xff] 0.0
      %79 = vst [vmem:[#allocation2 + $0xf8] sm:$0xff] 0.0
    $region25: #{tpu_custom_call.1} parent=1 // pred_fallthru
      _
    %v80 = vld [vmem:[#allocation2] sm:$0xff]
    %v81 = vld [vmem:[#allocation2 + $0x8] sm:$0xff]
    %v82 = vld [vmem:[#allocation2 + $0x10] sm:$0xff]
    %v83 = vld [vmem:[#allocation2 + $0x18] sm:$0xff]
    %v84 = vld [vmem:[#allocation2 + $0x20] sm:$0xff]
    %v85 = vld [vmem:[#allocation2 + $0x28] sm:$0xff]
    %v86 = vld [vmem:[#allocation2 + $0x30] sm:$0xff]
    %v87 = vld [vmem:[#allocation2 + $0x38] sm:$0xff]
    %v88 = vld [vmem:[#allocation2 + $0x40] sm:$0xff]
    %v89 = vld [vmem:[#allocation2 + $0x48] sm:$0xff]
    %v90 = vld [vmem:[#allocation2 + $0x50] sm:$0xff]
    %v91 = vld [vmem:[#allocation2 + $0x58] sm:$0xff]
    %v92 = vld [vmem:[#allocation2 + $0x60] sm:$0xff]
    %v93 = vld [vmem:[#allocation2 + $0x68] sm:$0xff]
    %v94 = vld [vmem:[#allocation2 + $0x70] sm:$0xff]
    %v95 = vld [vmem:[#allocation2 + $0x78] sm:$0xff]
    %v96 = vld [vmem:[#allocation2 + $0x80] sm:$0xff]
    %v97 = vld [vmem:[#allocation2 + $0x88] sm:$0xff]
    %v98 = vld [vmem:[#allocation2 + $0x90] sm:$0xff]
    %v99 = vld [vmem:[#allocation2 + $0x98] sm:$0xff]
    %v100 = vld [vmem:[#allocation2 + $0xa0] sm:$0xff]
    %v101 = vld [vmem:[#allocation2 + $0xa8] sm:$0xff]
    %v102 = vld [vmem:[#allocation2 + $0xb0] sm:$0xff]
    %v103 = vld [vmem:[#allocation2 + $0xb8] sm:$0xff]
    %v104 = vld [vmem:[#allocation2 + $0xc0] sm:$0xff]
    %v105 = vld [vmem:[#allocation2 + $0xc8] sm:$0xff]
    %v106 = vld [vmem:[#allocation2 + $0xd0] sm:$0xff]
    %v107 = vld [vmem:[#allocation2 + $0xd8] sm:$0xff]
    %v108 = vld [vmem:[#allocation2 + $0xe0] sm:$0xff]
    %v109 = vld [vmem:[#allocation2 + $0xe8] sm:$0xff]
    %v110 = vld [vmem:[#allocation2 + $0xf0] sm:$0xff]
    %v111 = vld [vmem:[#allocation2 + $0xf8] sm:$0xff]
    %v112 = vld [vmem:[#allocation3] sm:$0xf]
    %v113 = vld [vmem:[#allocation3 + $0x4] sm:$0xf]
    %v114 = vld [vmem:[#allocation3 + $0x8] sm:$0xf]
    %v115 = vld [vmem:[#allocation3 + $0xc] sm:$0xf]
    %v116 = vld [vmem:[#allocation3 + $0x10] sm:$0xf]
    %v117 = vld [vmem:[#allocation3 + $0x14] sm:$0xf]
    %v118 = vld [vmem:[#allocation3 + $0x18] sm:$0xf]
    %v119 = vld [vmem:[#allocation3 + $0x1c] sm:$0xf]
    %v120 = vld [vmem:[#allocation3 + $0x20] sm:$0xf]
    %v121 = vld [vmem:[#allocation3 + $0x24] sm:$0xf]
    %v122 = vld [vmem:[#allocation3 + $0x28] sm:$0xf]
    %v123 = vld [vmem:[#allocation3 + $0x2c] sm:$0xf]
    %v124 = vld [vmem:[#allocation3 + $0x30] sm:$0xf]
    %v125 = vld [vmem:[#allocation3 + $0x34] sm:$0xf]
    %v126 = vld [vmem:[#allocation3 + $0x38] sm:$0xf]
    %v127 = vld [vmem:[#allocation3 + $0x3c] sm:$0xf]
    %v128 = vld [vmem:[#allocation6] sm:$0xff]
    %v129 = vld [vmem:[#allocation6 + $0x8] sm:$0xff]
    %v130 = vld [vmem:[#allocation6 + $0x10] sm:$0xff]
    %v131 = vld [vmem:[#allocation6 + $0x18] sm:$0xff]
    %v132 = vld [vmem:[#allocation6 + $0x20] sm:$0xff]
    %v133 = vld [vmem:[#allocation6 + $0x28] sm:$0xff]
    %v134 = vld [vmem:[#allocation6 + $0x30] sm:$0xff]
    %v135 = vld [vmem:[#allocation6 + $0x38] sm:$0xff]
    %v136 = vld [vmem:[#allocation6 + $0x40] sm:$0xff]
    %v137 = vld [vmem:[#allocation6 + $0x48] sm:$0xff]
    %v138 = vld [vmem:[#allocation6 + $0x50] sm:$0xff]
    %v139 = vld [vmem:[#allocation6 + $0x58] sm:$0xff]
    %v140 = vld [vmem:[#allocation6 + $0x60] sm:$0xff]
    %v141 = vld [vmem:[#allocation6 + $0x68] sm:$0xff]
    %v142 = vld [vmem:[#allocation6 + $0x70] sm:$0xff]
    %v143 = vld [vmem:[#allocation6 + $0x78] sm:$0xff]
    %v160 = vunpack.c.l.b16 %v112
    %v161 = vunpack.c.l.b16 %v113
    %v162 = vunpack.c.l.b16 %v114
    %v163 = vunpack.c.l.b16 %v115
    %v164 = vunpack.c.l.b16 %v116
    %v165 = vunpack.c.l.b16 %v117
    %v166 = vunpack.c.l.b16 %v118
    %v167 = vunpack.c.l.b16 %v119
    %v168 = vunpack.c.l.b16 %v120
    %v169 = vunpack.c.l.b16 %v121
    %v170 = vunpack.c.l.b16 %v122
    %v171 = vunpack.c.l.b16 %v123
    %v172 = vunpack.c.l.b16 %v124
    %v173 = vunpack.c.l.b16 %v125
    %v174 = vunpack.c.l.b16 %v126
    %v175 = vunpack.c.l.b16 %v127
    %v176 = vpack.c.b16 %v161, %v160
    %v177 = vpack.c.b16 %v163, %v162
    %v178 = vpack.c.b16 %v165, %v164
    %v179 = vpack.c.b16 %v167, %v166
    %v180 = vpack.c.b16 %v169, %v168
    %v181 = vpack.c.b16 %v171, %v170
    %v182 = vpack.c.b16 %v173, %v172
    %v183 = vpack.c.b16 %v175, %v174
    %v208 = vunpack.c.l.b16 %v128
    %v209 = vunpack.c.h.b16 %v128
    %v210 = vunpack.c.l.b16 %v129
    %v211 = vunpack.c.h.b16 %v129
    %v212 = vunpack.c.l.b16 %v130
    %v213 = vunpack.c.h.b16 %v130
    %v214 = vunpack.c.l.b16 %v131
    %v215 = vunpack.c.h.b16 %v131
    %v216 = vunpack.c.l.b16 %v132
    %v217 = vunpack.c.h.b16 %v132
    %v218 = vunpack.c.l.b16 %v133
    %v219 = vunpack.c.h.b16 %v133
    %v220 = vunpack.c.l.b16 %v134
    %v221 = vunpack.c.h.b16 %v134
    %v222 = vunpack.c.l.b16 %v135
    %v223 = vunpack.c.h.b16 %v135
    %v224 = vunpack.c.l.b16 %v136
    %v225 = vunpack.c.h.b16 %v136
    %v226 = vunpack.c.l.b16 %v137
    %v227 = vunpack.c.h.b16 %v137
    %v228 = vunpack.c.l.b16 %v138
    %v229 = vunpack.c.h.b16 %v138
    %v230 = vunpack.c.l.b16 %v139
    %v231 = vunpack.c.h.b16 %v139
    %v232 = vunpack.c.l.b16 %v140
    %v233 = vunpack.c.h.b16 %v140
    %v234 = vunpack.c.l.b16 %v141
    %v235 = vunpack.c.h.b16 %v141
    %v236 = vunpack.c.l.b16 %v142
    %v237 = vunpack.c.h.b16 %v142
    %v238 = vunpack.c.l.b16 %v143
    %v239 = vunpack.c.h.b16 %v143
    %v240 = vpack.c.b16 %v210, %v208
    %v241 = vpack.c.b16 %v211, %v209
    %v242 = vpack.c.b16 %v214, %v212
    %v243 = vpack.c.b16 %v215, %v213
    %v244 = vpack.c.b16 %v218, %v216
    %v245 = vpack.c.b16 %v219, %v217
    %v246 = vpack.c.b16 %v222, %v220
    %v247 = vpack.c.b16 %v223, %v221
    %v248 = vpack.c.b16 %v226, %v224
    %v249 = vpack.c.b16 %v227, %v225
    %v250 = vpack.c.b16 %v230, %v228
    %v251 = vpack.c.b16 %v231, %v229
    %v252 = vpack.c.b16 %v234, %v232
    %v253 = vpack.c.b16 %v235, %v233
    %v254 = vpack.c.b16 %v238, %v236
    %v255 = vpack.c.b16 %v239, %v237
    %272 = vmatprep.subr.bf16.mxu0 %v241
    %273 = vmatpush1.bf16.msra.mxu0 %v240
    %274 = vmatprep.subr.bf16.mxu0 %v243
    %275 = vmatpush1.bf16.msra.mxu0 %v242
    %276 = vmatprep.subr.bf16.mxu0 %v245
    %277 = vmatpush1.bf16.msra.mxu0 %v244
    %278 = vmatprep.subr.bf16.mxu0 %v247
    %279 = vmatpush1.bf16.msra.mxu0 %v246
    %280 = vmatprep.subr.bf16.mxu0 %v249
    %281 = vmatpush1.bf16.msra.mxu0 %v248
    %282 = vmatprep.subr.bf16.mxu0 %v251
    %283 = vmatpush1.bf16.msra.mxu0 %v250
    %284 = vmatprep.subr.bf16.mxu0 %v253
    %285 = vmatpush1.bf16.msra.mxu0 %v252
    %286 = vmatprep.subr.bf16.mxu0 %v255
    %287 = vmatpush1.bf16.msra.mxu0 %v254
    %288 = vmatprep.subr.bf16.mxu0 0
    %289 = vmatpush1.bf16.msra.mxu0 0
    %290 = vmatprep.subr.bf16.mxu0 0
    %291 = vmatpush1.bf16.msra.mxu0 0
    %292 = vmatprep.subr.bf16.mxu0 0
    %293 = vmatpush1.bf16.msra.mxu0 0
    %294 = vmatprep.subr.bf16.mxu0 0
    %295 = vmatpush1.bf16.msra.mxu0 0
    %296 = vmatprep.subr.bf16.mxu0 0
    %297 = vmatpush1.bf16.msra.mxu0 0
    %298 = vmatprep.subr.bf16.mxu0 0
    %299 = vmatpush1.bf16.msra.mxu0 0
    %300 = vmatprep.subr.bf16.mxu0 0
    %301 = vmatpush1.bf16.msra.mxu0 0
    %302 = vmatprep.subr.bf16.mxu0 0
    %303 = vmatpush1.bf16.msra.mxu0 0
    %304 = vmatprep.mubr.bf16.mxu0 0
    %305 = vmatmul.mubr.bf16.gmra.mrb[0].mxu0 %v176
    %v306 = vpop.f32.mrb[0].mxu0
    %v307 = vadd.f32 0.0, %v306
    %v308 = vpop.f32.mrb[0].mxu0
    %v309 = vadd.f32 0.0, %v308
    %v310 = vpop.f32.mrb[0].mxu0
    %v311 = vadd.f32 0.0, %v310
    %v312 = vpop.f32.mrb[0].mxu0
    %v313 = vadd.f32 0.0, %v312
    %314 = vmatprep.mubr.bf16.mxu0 0
    %315 = vmatmul.mubr.bf16.gmra.mrb[0].mxu0 %v177
    %v316 = vpop.f32.mrb[0].mxu0
    %v317 = vadd.f32 0.0, %v316
    %v318 = vpop.f32.mrb[0].mxu0
    %v319 = vadd.f32 0.0, %v318
    %v320 = vpop.f32.mrb[0].mxu0
    %v321 = vadd.f32 0.0, %v320
    %v322 = vpop.f32.mrb[0].mxu0
    %v323 = vadd.f32 0.0, %v322
    %324 = vmatprep.mubr.bf16.mxu0 0
    %325 = vmatmul.mubr.bf16.gmra.mrb[0].mxu0 %v178
    %v326 = vpop.f32.mrb[0].mxu0
    %v327 = vadd.f32 0.0, %v326
    %v328 = vpop.f32.mrb[0].mxu0
    %v329 = vadd.f32 0.0, %v328
    %v330 = vpop.f32.mrb[0].mxu0
    %v331 = vadd.f32 0.0, %v330
    %v332 = vpop.f32.mrb[0].mxu0
    %v333 = vadd.f32 0.0, %v332
    %334 = vmatprep.mubr.bf16.mxu0 0
    %335 = vmatmul.mubr.bf16.gmra.mrb[0].mxu0 %v179
    %v336 = vpop.f32.mrb[0].mxu0
    %v337 = vadd.f32 0.0, %v336
    %v338 = vpop.f32.mrb[0].mxu0
    %v339 = vadd.f32 0.0, %v338
    %v340 = vpop.f32.mrb[0].mxu0
    %v341 = vadd.f32 0.0, %v340
    %v342 = vpop.f32.mrb[0].mxu0
    %v343 = vadd.f32 0.0, %v342
    %344 = vmatprep.mubr.bf16.mxu0 0
    %345 = vmatmul.mubr.bf16.gmra.mrb[0].mxu0 %v180
    %v346 = vpop.f32.mrb[0].mxu0
    %v347 = vadd.f32 0.0, %v346
    %v348 = vpop.f32.mrb[0].mxu0
    %v349 = vadd.f32 0.0, %v348
    %v350 = vpop.f32.mrb[0].mxu0
    %v351 = vadd.f32 0.0, %v350
    %v352 = vpop.f32.mrb[0].mxu0
    %v353 = vadd.f32 0.0, %v352
    %354 = vmatprep.mubr.bf16.mxu0 0
    %355 = vmatmul.mubr.bf16.gmra.mrb[0].mxu0 %v181
    %v356 = vpop.f32.mrb[0].mxu0
    %v357 = vadd.f32 0.0, %v356
    %v358 = vpop.f32.mrb[0].mxu0
    %v359 = vadd.f32 0.0, %v358
    %v360 = vpop.f32.mrb[0].mxu0
    %v361 = vadd.f32 0.0, %v360
    %v362 = vpop.f32.mrb[0].mxu0
    %v363 = vadd.f32 0.0, %v362
    %364 = vmatprep.mubr.bf16.mxu0 0
    %365 = vmatmul.mubr.bf16.gmra.mrb[0].mxu0 %v182
    %v366 = vpop.f32.mrb[0].mxu0
    %v367 = vadd.f32 0.0, %v366
    %v368 = vpop.f32.mrb[0].mxu0
    %v369 = vadd.f32 0.0, %v368
    %v370 = vpop.f32.mrb[0].mxu0
    %v371 = vadd.f32 0.0, %v370
    %v372 = vpop.f32.mrb[0].mxu0
    %v373 = vadd.f32 0.0, %v372
    %374 = vmatprep.mubr.bf16.mxu0 0
    %375 = vmatmul.mubr.bf16.gmra.mrb[0].mxu0 %v183
    %v376 = vpop.f32.mrb[0].mxu0
    %v377 = vadd.f32 0.0, %v376
    %v378 = vpop.f32.mrb[0].mxu0
    %v379 = vadd.f32 0.0, %v378
    %v380 = vpop.f32.mrb[0].mxu0
    %v381 = vadd.f32 0.0, %v380
    %v382 = vpop.f32.mrb[0].mxu0
    %v383 = vadd.f32 0.0, %v382
    %384 = vdwg.mxu0
    %v385 = vadd.f32 %v80, %v307
    %v386 = vadd.f32 %v81, %v309
    %v387 = vadd.f32 %v82, %v311
    %v388 = vadd.f32 %v83, %v313
    %v389 = vadd.f32 %v84, %v317
    %v390 = vadd.f32 %v85, %v319
    %v391 = vadd.f32 %v86, %v321
    %v392 = vadd.f32 %v87, %v323
    %v393 = vadd.f32 %v88, %v327
    %v394 = vadd.f32 %v89, %v329
    %v395 = vadd.f32 %v90, %v331
    %v396 = vadd.f32 %v91, %v333
    %v397 = vadd.f32 %v92, %v337
    %v398 = vadd.f32 %v93, %v339
    %v399 = vadd.f32 %v94, %v341
    %v400 = vadd.f32 %v95, %v343
    %v401 = vadd.f32 %v96, %v347
    %v402 = vadd.f32 %v97, %v349
    %v403 = vadd.f32 %v98, %v351
    %v404 = vadd.f32 %v99, %v353
    %v405 = vadd.f32 %v100, %v357
    %v406 = vadd.f32 %v101, %v359
    %v407 = vadd.f32 %v102, %v361
    %v408 = vadd.f32 %v103, %v363
    %v409 = vadd.f32 %v104, %v367
    %v410 = vadd.f32 %v105, %v369
    %v411 = vadd.f32 %v106, %v371
    %v412 = vadd.f32 %v107, %v373
    %v413 = vadd.f32 %v108, %v377
    %v414 = vadd.f32 %v109, %v379
    %v415 = vadd.f32 %v110, %v381
    %v416 = vadd.f32 %v111, %v383
    %417 = vst [vmem:[#allocation2] sm:$0xff] %v385
    %418 = vst [vmem:[#allocation2 + $0x8] sm:$0xff] %v386
    %419 = vst [vmem:[#allocation2 + $0x10] sm:$0xff] %v387
    %420 = vst [vmem:[#allocation2 + $0x18] sm:$0xff] %v388
    %421 = vst [vmem:[#allocation2 + $0x20] sm:$0xff] %v389
    %422 = vst [vmem:[#allocation2 + $0x28] sm:$0xff] %v390
    %423 = vst [vmem:[#allocation2 + $0x30] sm:$0xff] %v391
    %424 = vst [vmem:[#allocation2 + $0x38] sm:$0xff] %v392
    %425 = vst [vmem:[#allocation2 + $0x40] sm:$0xff] %v393
    %426 = vst [vmem:[#allocation2 + $0x48] sm:$0xff] %v394
    %427 = vst [vmem:[#allocation2 + $0x50] sm:$0xff] %v395
    %428 = vst [vmem:[#allocation2 + $0x58] sm:$0xff] %v396
    %429 = vst [vmem:[#allocation2 + $0x60] sm:$0xff] %v397
    %430 = vst [vmem:[#allocation2 + $0x68] sm:$0xff] %v398
    %431 = vst [vmem:[#allocation2 + $0x70] sm:$0xff] %v399
    %432 = vst [vmem:[#allocation2 + $0x78] sm:$0xff] %v400
    %433 = vst [vmem:[#allocation2 + $0x80] sm:$0xff] %v401
    %434 = vst [vmem:[#allocation2 + $0x88] sm:$0xff] %v402
    %435 = vst [vmem:[#allocation2 + $0x90] sm:$0xff] %v403
    %436 = vst [vmem:[#allocation2 + $0x98] sm:$0xff] %v404
    %437 = vst [vmem:[#allocation2 + $0xa0] sm:$0xff] %v405
    %438 = vst [vmem:[#allocation2 + $0xa8] sm:$0xff] %v406
    %439 = vst [vmem:[#allocation2 + $0xb0] sm:$0xff] %v407
    %440 = vst [vmem:[#allocation2 + $0xb8] sm:$0xff] %v408
    %441 = vst [vmem:[#allocation2 + $0xc0] sm:$0xff] %v409
    %442 = vst [vmem:[#allocation2 + $0xc8] sm:$0xff] %v410
    %443 = vst [vmem:[#allocation2 + $0xd0] sm:$0xff] %v411
    %444 = vst [vmem:[#allocation2 + $0xd8] sm:$0xff] %v412
    %445 = vst [vmem:[#allocation2 + $0xe0] sm:$0xff] %v413
    %446 = vst [vmem:[#allocation2 + $0xe8] sm:$0xff] %v414
    %447 = vst [vmem:[#allocation2 + $0xf0] sm:$0xff] %v415
    %448 = vst [vmem:[#allocation2 + $0xf8] sm:$0xff] %v416
    // Predicated region
    $region26: #{tpu_custom_call.1} parent=1 // pred_check
      %p449 = pneg %p44
    $region27: #{tpu_custom_call.1} parent=1 // pred_check_branch
      %451 = sbr.rel (%p449) target = $region29
    $region28: #{tpu_custom_call.1} parent=1 // pred_region
      %v452 = vld [vmem:[#allocation2] sm:$0xff]
      %v453 = vld [vmem:[#allocation2 + $0x8] sm:$0xff]
      %v454 = vld [vmem:[#allocation2 + $0x10] sm:$0xff]
      %v455 = vld [vmem:[#allocation2 + $0x18] sm:$0xff]
      %v456 = vld [vmem:[#allocation2 + $0x20] sm:$0xff]
      %v457 = vld [vmem:[#allocation2 + $0x28] sm:$0xff]
      %v458 = vld [vmem:[#allocation2 + $0x30] sm:$0xff]
      %v459 = vld [vmem:[#allocation2 + $0x38] sm:$0xff]
      %v460 = vld [vmem:[#allocation2 + $0x40] sm:$0xff]
      %v461 = vld [vmem:[#allocation2 + $0x48] sm:$0xff]
      %v462 = vld [vmem:[#allocation2 + $0x50] sm:$0xff]
      %v463 = vld [vmem:[#allocation2 + $0x58] sm:$0xff]
      %v464 = vld [vmem:[#allocation2 + $0x60] sm:$0xff]
      %v465 = vld [vmem:[#allocation2 + $0x68] sm:$0xff]
      %v466 = vld [vmem:[#allocation2 + $0x70] sm:$0xff]
      %v467 = vld [vmem:[#allocation2 + $0x78] sm:$0xff]
      %v468 = vld [vmem:[#allocation2 + $0x80] sm:$0xff]
      %v469 = vld [vmem:[#allocation2 + $0x88] sm:$0xff]
      %v470 = vld [vmem:[#allocation2 + $0x90] sm:$0xff]
      %v471 = vld [vmem:[#allocation2 + $0x98] sm:$0xff]
      %v472 = vld [vmem:[#allocation2 + $0xa0] sm:$0xff]
      %v473 = vld [vmem:[#allocation2 + $0xa8] sm:$0xff]
      %v474 = vld [vmem:[#allocation2 + $0xb0] sm:$0xff]
      %v475 = vld [vmem:[#allocation2 + $0xb8] sm:$0xff]
      %v476 = vld [vmem:[#allocation2 + $0xc0] sm:$0xff]
      %v477 = vld [vmem:[#allocation2 + $0xc8] sm:$0xff]
      %v478 = vld [vmem:[#allocation2 + $0xd0] sm:$0xff]
      %v479 = vld [vmem:[#allocation2 + $0xd8] sm:$0xff]
      %v480 = vld [vmem:[#allocation2 + $0xe0] sm:$0xff]
      %v481 = vld [vmem:[#allocation2 + $0xe8] sm:$0xff]
      %v482 = vld [vmem:[#allocation2 + $0xf0] sm:$0xff]
      %v483 = vld [vmem:[#allocation2 + $0xf8] sm:$0xff]
      %v484 = vld [vmem:[%s2] sm:$0x3]
      %v486 = vlaneseq
      %v487 = vshrl.u32 %v486, 7
      %v488 = vsub.s32 0, %v487
      %v489 = vrot.slane %v484, %v488
      %v490 = vlaneseq
      %v491 = vshrl.u32 %v490, 7
      %v492 = vsub.s32 1, %v491
      %v493 = vrot.slane %v484, %v492
      %v496 = vadd.f32 %v452, %v489
      %v497 = vadd.f32 %v453, %v493
      %v498 = vadd.f32 %v454, %v489
      %v499 = vadd.f32 %v455, %v493
      %v500 = vadd.f32 %v456, %v489
      %v501 = vadd.f32 %v457, %v493
      %v502 = vadd.f32 %v458, %v489
      %v503 = vadd.f32 %v459, %v493
      %v504 = vadd.f32 %v460, %v489
      %v505 = vadd.f32 %v461, %v493
      %v506 = vadd.f32 %v462, %v489
      %v507 = vadd.f32 %v463, %v493
      %v508 = vadd.f32 %v464, %v489
      %v509 = vadd.f32 %v465, %v493
      %v510 = vadd.f32 %v466, %v489
      %v511 = vadd.f32 %v467, %v493
      %v512 = vadd.f32 %v468, %v489
      %v513 = vadd.f32 %v469, %v493
      %v514 = vadd.f32 %v470, %v489
      %v515 = vadd.f32 %v471, %v493
      %v516 = vadd.f32 %v472, %v489
      %v517 = vadd.f32 %v473, %v493
      %v518 = vadd.f32 %v474, %v489
      %v519 = vadd.f32 %v475, %v493
      %v520 = vadd.f32 %v476, %v489
      %v521 = vadd.f32 %v477, %v493
      %v522 = vadd.f32 %v478, %v489
      %v523 = vadd.f32 %v479, %v493
      %v524 = vadd.f32 %v480, %v489
      %v525 = vadd.f32 %v481, %v493
      %v526 = vadd.f32 %v482, %v489
      %v527 = vadd.f32 %v483, %v493
      %528 = vst [vmem:[#allocation8] sm:$0xff] %v496
      %529 = vst [vmem:[#allocation8 + $0x8] sm:$0xff] %v497
      %530 = vst [vmem:[#allocation8 + $0x10] sm:$0xff] %v498
      %531 = vst [vmem:[#allocation8 + $0x18] sm:$0xff] %v499
      %532 = vst [vmem:[#allocation8 + $0x20] sm:$0xff] %v500
      %533 = vst [vmem:[#allocation8 + $0x28] sm:$0xff] %v501
      %534 = vst [vmem:[#allocation8 + $0x30] sm:$0xff] %v502
      %535 = vst [vmem:[#allocation8 + $0x38] sm:$0xff] %v503
      %536 = vst [vmem:[#allocation8 + $0x40] sm:$0xff] %v504
      %537 = vst [vmem:[#allocation8 + $0x48] sm:$0xff] %v505
      %538 = vst [vmem:[#allocation8 + $0x50] sm:$0xff] %v506
      %539 = vst [vmem:[#allocation8 + $0x58] sm:$0xff] %v507
      %540 = vst [vmem:[#allocation8 + $0x60] sm:$0xff] %v508
      %541 = vst [vmem:[#allocation8 + $0x68] sm:$0xff] %v509
      %542 = vst [vmem:[#allocation8 + $0x70] sm:$0xff] %v510
      %543 = vst [vmem:[#allocation8 + $0x78] sm:$0xff] %v511
      %544 = vst [vmem:[#allocation8 + $0x80] sm:$0xff] %v512
      %545 = vst [vmem:[#allocation8 + $0x88] sm:$0xff] %v513
      %546 = vst [vmem:[#allocation8 + $0x90] sm:$0xff] %v514
      %547 = vst [vmem:[#allocation8 + $0x98] sm:$0xff] %v515
      %548 = vst [vmem:[#allocation8 + $0xa0] sm:$0xff] %v516
      %549 = vst [vmem:[#allocation8 + $0xa8] sm:$0xff] %v517
      %550 = vst [vmem:[#allocation8 + $0xb0] sm:$0xff] %v518
      %551 = vst [vmem:[#allocation8 + $0xb8] sm:$0xff] %v519
      %552 = vst [vmem:[#allocation8 + $0xc0] sm:$0xff] %v520
      %553 = vst [vmem:[#allocation8 + $0xc8] sm:$0xff] %v521
      %554 = vst [vmem:[#allocation8 + $0xd0] sm:$0xff] %v522
      %555 = vst [vmem:[#allocation8 + $0xd8] sm:$0xff] %v523
      %556 = vst [vmem:[#allocation8 + $0xe0] sm:$0xff] %v524
      %557 = vst [vmem:[#allocation8 + $0xe8] sm:$0xff] %v525
      %558 = vst [vmem:[#allocation8 + $0xf0] sm:$0xff] %v526
      %559 = vst [vmem:[#allocation8 + $0xf8] sm:$0xff] %v527
    $region29: #{tpu_custom_call.1} parent=1 // pred_fallthru
      _
    // Predicated region
    $region30: #{tpu_custom_call.1} parent=1 // pred_check
      _
    $region31: #{tpu_custom_call.1} parent=1 // pred_check_branch
      %561 = sbr.rel (0) target = $region33
    $region32: #{tpu_custom_call.1} parent=1 // pred_region
      %s563 = ssub.s32 4096, 4096
      %564 = vsyncadd [#allocation5], %s563
      %s565 = sshll.u32 [#allocation8], 4
      %s566 = int_to_ptr.vmem [resolvable:$true] %s565
      %571 = dma.vmem_to_hbm [thread:$0]  %s566, 4096, %s3, [#allocation5], 256, 256, 16
    $region33: #{tpu_custom_call.1} parent=1 // pred_fallthru
      _
    // Predicated region
    $region34: #{tpu_custom_call.1} parent=1 // pred_check
      _
    $region35: #{tpu_custom_call.1} parent=1 // pred_check_branch
      %573 = sbr.rel (0) target = $region37
    $region36: #{tpu_custom_call.1} parent=1 // pred_region
      %574 = dma.done [#allocation5], 4096
    $region37: #{tpu_custom_call.1} parent=1 // pred_fallthru
      _
    %575 = vsyncpa [#allocation4], 1
    %576 = vsyncpa [#allocation7], 1
    %577 = vsyncpa [#allocation5], 1

</llo_original>
